<compile_context>
chip_gen: v6e
topology: v6e:2x2x1
jax: 0.10.0
libtpu: 0.0.40
codegen_flags: <defaults>
</compile_context>

<pallas_src>
import functools

import jax
import jax.numpy as jnp
from jax.experimental import pallas as pl
from jax.experimental.pallas import tpu as pltpu

_LANE = 128


def _round_up(n, m):
    return ((n + m - 1) // m) * m


# ----------------------------------------------------------------------------
# Fused Pallas kernel:  (folded psi) -> fc1 -> tanh -> fc2 -> leaky_relu ->
#                        fc4 -> sigmoid
# ----------------------------------------------------------------------------
def _small_dot(a, w):
    # (B, K) @ (K, N) for tiny static K (1 or 2 here) via VPU broadcast-mul;
    # avoids wasting an MXU push/pop on a degenerate contraction.
    acc = a[:, 0:1] * w[0:1, :]
    for k in range(1, a.shape[1]):
        acc = acc + a[:, k : k + 1] * w[k : k + 1, :]
    return acc


def _disc_fused_kernel(in_dim, psi_dim,
                       xin_ref,
                       w1x_ref, w1psi_ref, w1t_ref, b1_ref,
                       w2_ref, b2_ref,
                       w4_ref, b4_ref,
                       o_ref):
    xin = xin_ref[...]                              # (Bblk, in_dim + psi_dim + X_dim)
    x = xin[:, :in_dim]                             # (Bblk, in_dim)
    psi = xin[:, in_dim:in_dim + psi_dim]           # (Bblk, psi_dim)
    tail = xin[:, in_dim + psi_dim:]                # (Bblk, X_dim)

    # fc1 on the virtual concat [x, pc(psi), tail].  The pc linear is already
    # folded into w1psi / b1 at prep time, so the psi contribution is a tiny
    # K=psi_dim VPU broadcast-sum.  x-part runs bf16 on the MXU, f32 accumulate.
    z1 = (jnp.dot(x.astype(jnp.bfloat16), w1x_ref[...],
                  preferred_element_type=jnp.float32)
          + _small_dot(psi, w1psi_ref[...])
          + _small_dot(tail, w1t_ref[...])
          + b1_ref[...])
    h1 = jnp.tanh(z1)

    # fc2 + leaky_relu (PyTorch default slope 0.01).
    z2 = jnp.dot(h1.astype(jnp.bfloat16), w2_ref[...],
                 preferred_element_type=jnp.float32) + b2_ref[...]
    h2 = jnp.maximum(z2, 0.01 * z2)

    # fc4 (hidden -> 1): VPU multiply + lane reduction instead of N=1 matmul.
    z4 = jnp.sum(h2 * w4_ref[...], axis=-1, keepdims=True) + b4_ref[...]
    o_ref[...] = jax.nn.sigmoid(z4)


# ----------------------------------------------------------------------------
# Wrapper
# ----------------------------------------------------------------------------
def discriminator_forward(x, params, pw, in_dim, psi_dim,
                          *, max_block_b=1024, min_grid_steps=2):
    """x: (B, in_dim), params: (B, psi_dim + X_dim), pw: prepared weight dict."""
    B = x.shape[0]
    P = params.shape[1]
    W = in_dim + P
    H_pad = pw["fc1_b"].shape[1]

    # One lane-contiguous input operand instead of two per-step DMAs.
    xin = jnp.concatenate([x, params], axis=1).astype(jnp.float32)   # (B, W)

    # Batch tile: multiple of 8 sublanes, capped for v7x's 64 MiB VMEM, and
    # sized so there are >= min_grid_steps grid steps when B allows (so the
    # "parallel" axis can shard across both TensorCores on v7x).
    block_b = _round_up(max(pl.cdiv(B, min_grid_steps), 1), 8)
    block_b = max(8, min(block_b, max_block_b))
    B_pad = _round_up(B, block_b)
    if B_pad != B:
        xin = jnp.pad(xin, ((0, B_pad - B), (0, 0)))
    grid = (B_pad // block_b,)

    def const_spec(a):
        return pl.BlockSpec(a.shape, lambda i: (0, 0))   # weights stay resident

    flops = 2 * B_pad * ((in_dim + psi_dim + (P - psi_dim)) * H_pad
                         + H_pad * H_pad
                         + H_pad)
    weight_bytes = sum(int(pw[k].size) * pw[k].dtype.itemsize for k in
                       ("w1x", "w1psi", "w1t", "fc1_b",
                        "fc2_w", "fc2_b", "fc4_w", "fc4_b"))
    bytes_accessed = 4 * (xin.size + B_pad) + weight_bytes
    cost = pl.CostEstimate(flops=flops,
                           transcendentals=B_pad * (H_pad + 1),
                           bytes_accessed=bytes_accessed)

    kernel = functools.partial(_disc_fused_kernel, in_dim, psi_dim)
    out = pl.pallas_call(
        kernel,
        out_shape=jax.ShapeDtypeStruct((B_pad, 1), jnp.float32),
        grid=grid,
        in_specs=[
            pl.BlockSpec((block_b, W), lambda i: (i, 0)),   # [x | params]
            const_spec(pw["w1x"]),
            const_spec(pw["w1psi"]),
            const_spec(pw["w1t"]),
            const_spec(pw["fc1_b"]),
            const_spec(pw["fc2_w"]),
            const_spec(pw["fc2_b"]),
            const_spec(pw["fc4_w"]),
            const_spec(pw["fc4_b"]),
        ],
        out_specs=pl.BlockSpec((block_b, 1), lambda i: (i, 0)),
        compiler_params=pltpu.CompilerParams(
            dimension_semantics=("parallel",)),
        cost_estimate=cost,
    )(xin,
      pw["w1x"], pw["w1psi"], pw["w1t"], pw["fc1_b"],
      pw["fc2_w"], pw["fc2_b"],
      pw["fc4_w"], pw["fc4_b"])
    return out[:B]


# ----------------------------------------------------------------------------
# Deterministic parameter init (xavier_normal weights, zero bias)
# ----------------------------------------------------------------------------
def _xavier_normal(key, fan_in, fan_out):
    std = (2.0 / (fan_in + fan_out)) ** 0.5
    # stored as (in, out) so kernels compute x @ W
    return std * jax.random.normal(key, (fan_in, fan_out), dtype=jnp.float32)


def init_weights(key, in_dim, X_dim, psi_dim, pc_out_dim, hidden_dim):
    keys = jax.random.split(key, 5)
    fc1_in = in_dim + X_dim + pc_out_dim
    return {
        "pc_w": _xavier_normal(keys[0], psi_dim, pc_out_dim),
        "pc_b": jnp.zeros((1, pc_out_dim), jnp.float32),
        "fc1_w": _xavier_normal(keys[1], fc1_in, hidden_dim),
        "fc1_b": jnp.zeros((1, hidden_dim), jnp.float32),
        "fc2_w": _xavier_normal(keys[2], hidden_dim, hidden_dim),
        "fc2_b": jnp.zeros((1, hidden_dim), jnp.float32),
        # fc3 exists in __init__ but is never used in forward — kept for parity.
        "fc3_w": _xavier_normal(keys[3], hidden_dim, hidden_dim),
        "fc3_b": jnp.zeros((1, hidden_dim), jnp.float32),
        "fc4_w": _xavier_normal(keys[4], hidden_dim, 1),
        "fc4_b": jnp.zeros((1, 1), jnp.float32),
    }


def prepare_weights(w, in_dim, *, lane=_LANE):
    """Fold the affine psi_compressor into fc1, split fc1 by concat segment,
    zero-pad feature dims to lane width, and cast MXU operands to bf16.

    Zero padding is numerically identical (zero rows/cols/biases contribute
    nothing); the pc fold is exact because pc is affine.  One-time prep; do
    not call per forward.
    """
    H = w["fc2_w"].shape[1]
    pc_out = w["pc_w"].shape[1]
    H_pad = _round_up(H, lane)

    def pad(a, rows=None, cols=None):
        r = a.shape[0] if rows is None else rows
        c = a.shape[1] if cols is None else cols
        return jnp.pad(a, ((0, r - a.shape[0]), (0, c - a.shape[1])))

    fc1_w = w["fc1_w"]   # rows ordered [x(in_dim), psi_emb(pc_out), tail(X_dim)]
    w1x = fc1_w[:in_dim]                                   # (in_dim, H)
    w1p = fc1_w[in_dim:in_dim + pc_out]                    # (pc_out, H)
    w1t = fc1_w[in_dim + pc_out:]                          # (X_dim, H)

    # Fold pc:   pc(psi) @ w1p = psi @ (pc_w @ w1p) + pc_b @ w1p
    w1psi = w["pc_w"] @ w1p                                # (psi_dim, H)
    b1_fold = w["fc1_b"] + w["pc_b"] @ w1p                 # (1, H)

    return {
        "w1x": pad(w1x, cols=H_pad).astype(jnp.bfloat16),        # MXU operand
        "w1psi": pad(w1psi, cols=H_pad),                          # tiny, VPU, f32
        "w1t": pad(w1t, cols=H_pad),                              # tiny, VPU, f32
        "fc1_b": pad(b1_fold, cols=H_pad),
        "fc2_w": pad(w["fc2_w"], rows=H_pad, cols=H_pad).astype(jnp.bfloat16),
        "fc2_b": pad(w["fc2_b"], cols=H_pad),
        "fc4_w": pad(w["fc4_w"].T, cols=H_pad),            # (1, H_pad) row for VPU reduce
        "fc4_b": w["fc4_b"],                               # (1, 1)
    }


# ----------------------------------------------------------------------------
# Pure-JAX reference (unpadded f32 weights) for correctness check
# ----------------------------------------------------------------------------
def reference_forward(x, params, w, psi_dim):
    psi_embedding = params[:, :psi_dim] @ w["pc_w"] + w["pc_b"]
    x_cat = jnp.concatenate([x, psi_embedding, params[:, psi_dim:]], axis=1)
    h1 = jnp.tanh(x_cat @ w["fc1_w"] + w["fc1_b"])
    z2 = h1 @ w["fc2_w"] + w["fc2_b"]
    h2 = jnp.where(z2 > 0, z2, 0.01 * z2)
    return jax.nn.sigmoid(h2 @ w["fc4_w"] + w["fc4_b"])


if __name__ == "__main__":
    # Small shapes consistent with the module's forward.
    B = 8
    in_dim = 16
    X_dim = 1
    psi_dim = 2
    pc_out_dim = 8      # psi_compressor.out_dim (stand-in)
    hidden_dim = 32

    key = jax.random.PRNGKey(0)
    kx, kp, kw = jax.random.split(key, 3)
    x = jax.random.normal(kx, (B, in_dim), dtype=jnp.float32)
    params = jax.random.normal(kp, (B, psi_dim + X_dim), dtype=jnp.float32)

    weights = init_weights(kw, in_dim, X_dim, psi_dim, pc_out_dim, hidden_dim)
    prepared = prepare_weights(weights, in_dim)

    score = discriminator_forward(x, params, prepared, in_dim, psi_dim)
    score = jax.block_until_ready(score)

    ref = reference_forward(x, params, weights, psi_dim)
    assert score.shape == (B, 1)
    # bf16 MXU operands (f32 accumulation) -> loosened tolerance vs f32 reference.
    assert jnp.allclose(score, ref, atol=1e-2, rtol=1e-2), "mismatch vs reference"

    print("KERNEL_OK")
</pallas_src>

<mosaic_0001>
module attributes {stable_mosaic.version = 11 : i64} {
  func.func @_disc_fused_kernel(%arg0: i32, %arg1: memref<8x19xf32, #tpu.memory_space<vmem>>, %arg2: memref<16x128xbf16, #tpu.memory_space<vmem>>, %arg3: memref<2x128xf32, #tpu.memory_space<vmem>>, %arg4: memref<1x128xf32, #tpu.memory_space<vmem>>, %arg5: memref<1x128xf32, #tpu.memory_space<vmem>>, %arg6: memref<128x128xbf16, #tpu.memory_space<vmem>>, %arg7: memref<1x128xf32, #tpu.memory_space<vmem>>, %arg8: memref<1x128xf32, #tpu.memory_space<vmem>>, %arg9: memref<1x1xf32, #tpu.memory_space<vmem>>, %arg10: memref<8x1xf32, #tpu.memory_space<vmem>>) attributes {dimension_semantics = [#tpu.dimension_semantics<parallel>], iteration_bounds = array<i64: 1>, scalar_prefetch = 0 : i64, scratch_operands = 0 : i64, tpu.core_type = #tpu.core_type<tc>, window_params = [{transform_indices = @transform_0, window_bounds = array<i64: 8, 19>}, {pipeline_mode = #tpu.pipeline_mode<synchronous>, transform_indices = @transform_1, window_bounds = array<i64: 16, 128>}, {pipeline_mode = #tpu.pipeline_mode<synchronous>, transform_indices = @transform_2, window_bounds = array<i64: 2, 128>}, {pipeline_mode = #tpu.pipeline_mode<synchronous>, transform_indices = @transform_3, window_bounds = array<i64: 1, 128>}, {pipeline_mode = #tpu.pipeline_mode<synchronous>, transform_indices = @transform_4, window_bounds = array<i64: 1, 128>}, {pipeline_mode = #tpu.pipeline_mode<synchronous>, transform_indices = @transform_5, window_bounds = array<i64: 128, 128>}, {pipeline_mode = #tpu.pipeline_mode<synchronous>, transform_indices = @transform_6, window_bounds = array<i64: 1, 128>}, {pipeline_mode = #tpu.pipeline_mode<synchronous>, transform_indices = @transform_7, window_bounds = array<i64: 1, 128>}, {pipeline_mode = #tpu.pipeline_mode<synchronous>, transform_indices = @transform_8, window_bounds = array<i64: 1, 1>}, {transform_indices = @transform_9, window_bounds = array<i64: 8, 1>}]} {
    %c0 = arith.constant 0 : index
    %c0_0 = arith.constant 0 : index
    %0 = vector.load %arg1[%c0, %c0_0] : memref<8x19xf32, #tpu.memory_space<vmem>>, vector<8x19xf32>
    %1 = vector.extract_strided_slice %0 {offsets = [0, 0], sizes = [8, 16], strides = [1, 1]} : vector<8x19xf32> to vector<8x16xf32>
    %2 = vector.extract_strided_slice %0 {offsets = [0, 16], sizes = [8, 2], strides = [1, 1]} : vector<8x19xf32> to vector<8x2xf32>
    %3 = vector.extract_strided_slice %0 {offsets = [0, 18], sizes = [8, 1], strides = [1, 1]} : vector<8x19xf32> to vector<8x1xf32>
    %4 = arith.truncf %1 : vector<8x16xf32> to vector<8x16xbf16>
    %c0_1 = arith.constant 0 : index
    %c0_2 = arith.constant 0 : index
    %5 = vector.load %arg2[%c0_1, %c0_2] : memref<16x128xbf16, #tpu.memory_space<vmem>>, vector<16x128xbf16>
    %cst = arith.constant dense<0.000000e+00> : vector<8x128xf32>
    %6 = tpu.matmul %4, %5, %cst {dimension_numbers = #tpu.dot_dimension_numbers<[1], [0], [0], [1], [0, 0, 1, 1], [], []>} : vector<8x16xbf16>, vector<16x128xbf16>, vector<8x128xf32> -> vector<8x128xf32>
    %c0_3 = arith.constant 0 : index
    %c0_4 = arith.constant 0 : index
    %7 = vector.load %arg3[%c0_3, %c0_4] : memref<2x128xf32, #tpu.memory_space<vmem>>, vector<2x128xf32>
    %8 = vector.extract_strided_slice %2 {offsets = [0, 0], sizes = [8, 1], strides = [1, 1]} : vector<8x2xf32> to vector<8x1xf32>
    %9 = vector.extract_strided_slice %7 {offsets = [0, 0], sizes = [1, 128], strides = [1, 1]} : vector<2x128xf32> to vector<1x128xf32>
    %10 = vector.broadcast %8 : vector<8x1xf32> to vector<8x128xf32>
    %11 = vector.broadcast %9 : vector<1x128xf32> to vector<8x128xf32>
    %12 = arith.mulf %10, %11 : vector<8x128xf32>
    %13 = vector.extract_strided_slice %2 {offsets = [0, 1], sizes = [8, 1], strides = [1, 1]} : vector<8x2xf32> to vector<8x1xf32>
    %14 = vector.extract_strided_slice %7 {offsets = [1, 0], sizes = [1, 128], strides = [1, 1]} : vector<2x128xf32> to vector<1x128xf32>
    %15 = vector.broadcast %13 : vector<8x1xf32> to vector<8x128xf32>
    %16 = vector.broadcast %14 : vector<1x128xf32> to vector<8x128xf32>
    %17 = arith.mulf %15, %16 : vector<8x128xf32>
    %18 = arith.addf %12, %17 : vector<8x128xf32>
    %19 = arith.addf %6, %18 : vector<8x128xf32>
    %c0_5 = arith.constant 0 : index
    %c0_6 = arith.constant 0 : index
    %20 = vector.load %arg4[%c0_5, %c0_6] : memref<1x128xf32, #tpu.memory_space<vmem>>, vector<1x128xf32>
    %21 = vector.broadcast %3 : vector<8x1xf32> to vector<8x128xf32>
    %22 = vector.broadcast %20 : vector<1x128xf32> to vector<8x128xf32>
    %23 = arith.mulf %21, %22 : vector<8x128xf32>
    %24 = arith.addf %19, %23 : vector<8x128xf32>
    %c0_7 = arith.constant 0 : index
    %c0_8 = arith.constant 0 : index
    %25 = vector.load %arg5[%c0_7, %c0_8] : memref<1x128xf32, #tpu.memory_space<vmem>>, vector<1x128xf32>
    %26 = vector.broadcast %25 : vector<1x128xf32> to vector<8x128xf32>
    %27 = arith.addf %24, %26 : vector<8x128xf32>
    %28 = math.tanh %27 : vector<8x128xf32>
    %29 = arith.truncf %28 : vector<8x128xf32> to vector<8x128xbf16>
    %c0_9 = arith.constant 0 : index
    %c0_10 = arith.constant 0 : index
    %30 = vector.load %arg6[%c0_9, %c0_10] : memref<128x128xbf16, #tpu.memory_space<vmem>>, vector<128x128xbf16>
    %cst_11 = arith.constant dense<0.000000e+00> : vector<8x128xf32>
    %31 = tpu.matmul %29, %30, %cst_11 {dimension_numbers = #tpu.dot_dimension_numbers<[1], [0], [0], [1], [0, 0, 1, 1], [], []>} : vector<8x128xbf16>, vector<128x128xbf16>, vector<8x128xf32> -> vector<8x128xf32>
    %c0_12 = arith.constant 0 : index
    %c0_13 = arith.constant 0 : index
    %32 = vector.load %arg7[%c0_12, %c0_13] : memref<1x128xf32, #tpu.memory_space<vmem>>, vector<1x128xf32>
    %33 = vector.broadcast %32 : vector<1x128xf32> to vector<8x128xf32>
    %34 = arith.addf %31, %33 : vector<8x128xf32>
    %cst_14 = arith.constant 0.00999999977 : f32
    %35 = vector.broadcast %cst_14 : f32 to vector<8x128xf32>
    %36 = arith.mulf %35, %34 : vector<8x128xf32>
    %37 = arith.maximumf %34, %36 : vector<8x128xf32>
    %c0_15 = arith.constant 0 : index
    %c0_16 = arith.constant 0 : index
    %38 = vector.load %arg8[%c0_15, %c0_16] : memref<1x128xf32, #tpu.memory_space<vmem>>, vector<1x128xf32>
    %39 = vector.broadcast %38 : vector<1x128xf32> to vector<8x128xf32>
    %40 = arith.mulf %37, %39 : vector<8x128xf32>
    %cst_17 = arith.constant dense<0.000000e+00> : vector<8xf32>
    %41 = vector.multi_reduction <add>, %40, %cst_17 [1] : vector<8x128xf32> to vector<8xf32>
    %42 = vector.shape_cast %41 : vector<8xf32> to vector<8x1xf32>
    %c0_18 = arith.constant 0 : index
    %c0_19 = arith.constant 0 : index
    %43 = vector.load %arg9[%c0_18, %c0_19] : memref<1x1xf32, #tpu.memory_space<vmem>>, vector<1x1xf32>
    %44 = vector.broadcast %43 : vector<1x1xf32> to vector<8x1xf32>
    %45 = arith.addf %42, %44 : vector<8x1xf32>
    %46 = arith.negf %45 : vector<8x1xf32>
    %47 = math.exp %46 : vector<8x1xf32>
    %cst_20 = arith.constant 1.000000e+00 : f32
    %48 = vector.broadcast %cst_20 : f32 to vector<8x1xf32>
    %49 = arith.addf %48, %47 : vector<8x1xf32>
    %50 = arith.divf %48, %49 : vector<8x1xf32>
    %c0_21 = arith.constant 0 : index
    %c0_22 = arith.constant 0 : index
    %51 = vector.load %arg10[%c0_21, %c0_22] : memref<8x1xf32, #tpu.memory_space<vmem>>, vector<8x1xf32>
    tpu.vector_store %arg10[%c0_21, %c0_22], %50 {strides = array<i32>} : memref<8x1xf32, #tpu.memory_space<vmem>>, vector<8x1xf32>,
    return
  }
  func.func @transform_0(%arg0: i32) -> (i32, i32) {
    %c0_i32 = arith.constant 0 : i32
    %c0_i32_0 = arith.constant 0 : i32
    return %arg0, %c0_i32 : i32, i32
  }
  func.func @transform_1(%arg0: i32) -> (i32, i32) {
    %c0_i32 = arith.constant 0 : i32
    %c0_i32_0 = arith.constant 0 : i32
    %c0_i32_1 = arith.constant 0 : i32
    return %c0_i32, %c0_i32_0 : i32, i32
  }
  func.func @transform_2(%arg0: i32) -> (i32, i32) {
    %c0_i32 = arith.constant 0 : i32
    %c0_i32_0 = arith.constant 0 : i32
    %c0_i32_1 = arith.constant 0 : i32
    return %c0_i32, %c0_i32_0 : i32, i32
  }
  func.func @transform_3(%arg0: i32) -> (i32, i32) {
    %c0_i32 = arith.constant 0 : i32
    %c0_i32_0 = arith.constant 0 : i32
    %c0_i32_1 = arith.constant 0 : i32
    return %c0_i32, %c0_i32_0 : i32, i32
  }
  func.func @transform_4(%arg0: i32) -> (i32, i32) {
    %c0_i32 = arith.constant 0 : i32
    %c0_i32_0 = arith.constant 0 : i32
    %c0_i32_1 = arith.constant 0 : i32
    return %c0_i32, %c0_i32_0 : i32, i32
  }
  func.func @transform_5(%arg0: i32) -> (i32, i32) {
    %c0_i32 = arith.constant 0 : i32
    %c0_i32_0 = arith.constant 0 : i32
    %c0_i32_1 = arith.constant 0 : i32
    return %c0_i32, %c0_i32_0 : i32, i32
  }
  func.func @transform_6(%arg0: i32) -> (i32, i32) {
    %c0_i32 = arith.constant 0 : i32
    %c0_i32_0 = arith.constant 0 : i32
    %c0_i32_1 = arith.constant 0 : i32
    return %c0_i32, %c0_i32_0 : i32, i32
  }
  func.func @transform_7(%arg0: i32) -> (i32, i32) {
    %c0_i32 = arith.constant 0 : i32
    %c0_i32_0 = arith.constant 0 : i32
    %c0_i32_1 = arith.constant 0 : i32
    return %c0_i32, %c0_i32_0 : i32, i32
  }
  func.func @transform_8(%arg0: i32) -> (i32, i32) {
    %c0_i32 = arith.constant 0 : i32
    %c0_i32_0 = arith.constant 0 : i32
    %c0_i32_1 = arith.constant 0 : i32
    return %c0_i32, %c0_i32_0 : i32, i32
  }
  func.func @transform_9(%arg0: i32) -> (i32, i32) {
    %c0_i32 = arith.constant 0 : i32
    %c0_i32_0 = arith.constant 0 : i32
    return %arg0, %c0_i32 : i32, i32
  }
}

</mosaic_0001>

<llo_original>
// kernel: tpu_custom_call.1
$region0: #{tpu_custom_call.1}
  #allocation0 [shape = 'u32[]', space=smem, size = 0x4, offset = 0x4, fixed_abs, tag = 'smem constant byte address 0x4 - core index']
  #allocation1 [shape = 'u32[144,128]{1,0:T(1,128)}', space=vmem, size = 0x12000, scoped, tag = 'internal scratch']
  #allocation2 [shape = 'f32[1,1]{1,0:T(1,128)S(1)}', space=vmem, size = 0x200, scoped, tag = 'scoped memory for tpu_custom_call.1']
  %s0 = inlined_call_operand.hbm [shape: f32[8,19], index: 0, kind: input, shape index: {}]
  %s1 = inlined_call_operand.hbm [shape: bf16[16,128], index: 1, kind: input, shape index: {}]
  %s2 = inlined_call_operand.vmem [shape: f32[2,128], index: 2, kind: input, shape index: {}]
  %s3 = inlined_call_operand.vmem [shape: f32[1,128], index: 3, kind: input, shape index: {}]
  %s4 = inlined_call_operand.vmem [shape: f32[1,128], index: 4, kind: input, shape index: {}]
  %s5 = inlined_call_operand.hbm [shape: bf16[128,128], index: 5, kind: input, shape index: {}]
  %s6 = inlined_call_operand.vmem [shape: f32[1,128], index: 6, kind: input, shape index: {}]
  %s7 = inlined_call_operand.vmem [shape: f32[1,128], index: 7, kind: input, shape index: {}]
  %s8 = inlined_call_operand.<no memory space> [shape: f32[1,1], index: 8, kind: input, shape index: {}]
  %s9 = inlined_call_operand.vmem [shape: f32[8,1], index: 9, kind: output, shape index: {}]
  %s10 = sld [smem:[#allocation0]]
  $region58: #{tpu_custom_call.1} parent=0
    _
  %s12 = ssub.s32 1, %s10
  %s13 = scalar_select 0, %s12, %s10
  %v14 = vstv %s8
  %15 = vst [vmem:[#allocation2] sm:$0x1] %v14
  $region1: #{tpu_custom_call.1} parent=0
    #allocation3 [shape = 'u8[4096]{0}', space=vmem, size = 0x1000, scoped, tag = 'input window, operand 0, single buffered']
    #allocation4 [shape = 's32[1]{0}', space=sflag, size = 0x4, scoped, tag = 'scoped memory for tpu_custom_call.1']
    #allocation5 [shape = 'u8[4096]{0}', space=vmem, size = 0x1000, scoped, tag = 'input window, operand 1, single buffered']
    #allocation6 [shape = 's32[1]{0}', space=sflag, size = 0x4, scoped, tag = 'scoped memory for tpu_custom_call.1']
    #allocation7 [shape = 'u8[32768]{0}', space=vmem, size = 0x8000, scoped, tag = 'input window, operand 5, single buffered']
    %16 = vsyncpa [#allocation4], 0
    %17 = vsyncpa [#allocation6], 0
    // Predicated region
    $region2: #{tpu_custom_call.1} parent=1 // pred_check
      _
    $region3: #{tpu_custom_call.1} parent=1 // pred_check_branch
      %19 = sbr.rel (0) target = $region5
    $region4: #{tpu_custom_call.1} parent=1 // pred_region
      %s21 = ssub.s32 128, 128
      %22 = vsyncadd [#allocation4], %s21
      %s24 = sshll.u32 [#allocation3], 4
      %s25 = int_to_ptr.vmem [resolvable:$true] %s24
      %27 = dma.hbm_to_vmem [thread:$0]  %s0, 128, %s25, [#allocation4]
    $region5: #{tpu_custom_call.1} parent=1 // pred_fallthru
      _
    // Predicated region
    $region6: #{tpu_custom_call.1} parent=1 // pred_check
      _
    $region7: #{tpu_custom_call.1} parent=1 // pred_check_branch
      %29 = sbr.rel (0) target = $region9
    $region8: #{tpu_custom_call.1} parent=1 // pred_region
      %s31 = ssub.s32 128, 128
      %32 = vsyncadd [#allocation6], %s31
      %s33 = sshll.u32 [#allocation5], 4
      %s34 = int_to_ptr.vmem [resolvable:$true] %s33
      %39 = dma.hbm_to_vmem [thread:$0]  %s1, 128, %s34, [#allocation6], 64, 64, 4
    $region9: #{tpu_custom_call.1} parent=1 // pred_fallthru
      _
    // Predicated region
    $region10: #{tpu_custom_call.1} parent=1 // pred_check
      _
    $region11: #{tpu_custom_call.1} parent=1 // pred_check_branch
      %41 = sbr.rel (0) target = $region13
    $region12: #{tpu_custom_call.1} parent=1 // pred_region
      _
    $region13: #{tpu_custom_call.1} parent=1 // pred_fallthru
      _
    // Predicated region
    $region14: #{tpu_custom_call.1} parent=1 // pred_check
      _
    $region15: #{tpu_custom_call.1} parent=1 // pred_check_branch
      %43 = sbr.rel (0) target = $region17
    $region16: #{tpu_custom_call.1} parent=1 // pred_region
      _
    $region17: #{tpu_custom_call.1} parent=1 // pred_fallthru
      _
    // Predicated region
    $region18: #{tpu_custom_call.1} parent=1 // pred_check
      _
    $region19: #{tpu_custom_call.1} parent=1 // pred_check_branch
      %45 = sbr.rel (0) target = $region21
    $region20: #{tpu_custom_call.1} parent=1 // pred_region
      _
    $region21: #{tpu_custom_call.1} parent=1 // pred_fallthru
      _
    // Predicated region
    $region22: #{tpu_custom_call.1} parent=1 // pred_check
      _
    $region23: #{tpu_custom_call.1} parent=1 // pred_check_branch
      %47 = sbr.rel (0) target = $region25
    $region24: #{tpu_custom_call.1} parent=1 // pred_region
      %s49 = ssub.s32 1024, 1024
      %50 = vsyncadd [#allocation6], %s49
      %s51 = sshll.u32 [#allocation7], 4
      %s52 = int_to_ptr.vmem [resolvable:$true] %s51
      %57 = dma.hbm_to_vmem [thread:$0]  %s5, 1024, %s52, [#allocation6], 64, 64, 4
    $region25: #{tpu_custom_call.1} parent=1 // pred_fallthru
      _
    // Predicated region
    $region26: #{tpu_custom_call.1} parent=1 // pred_check
      _
    $region27: #{tpu_custom_call.1} parent=1 // pred_check_branch
      %59 = sbr.rel (0) target = $region29
    $region28: #{tpu_custom_call.1} parent=1 // pred_region
      _
    $region29: #{tpu_custom_call.1} parent=1 // pred_fallthru
      _
    // Predicated region
    $region30: #{tpu_custom_call.1} parent=1 // pred_check
      _
    $region31: #{tpu_custom_call.1} parent=1 // pred_check_branch
      %61 = sbr.rel (0) target = $region33
    $region32: #{tpu_custom_call.1} parent=1 // pred_region
      _
    $region33: #{tpu_custom_call.1} parent=1 // pred_fallthru
      _
    // Predicated region
    $region34: #{tpu_custom_call.1} parent=1 // pred_check
      _
    $region35: #{tpu_custom_call.1} parent=1 // pred_check_branch
      %63 = sbr.rel (0) target = $region37
    $region36: #{tpu_custom_call.1} parent=1 // pred_region
      _
    $region37: #{tpu_custom_call.1} parent=1 // pred_fallthru
      _
    // Predicated region
    $region38: #{tpu_custom_call.1} parent=1 // pred_check
      _
    $region39: #{tpu_custom_call.1} parent=1 // pred_check_branch
      %65 = sbr.rel (0) target = $region41
    $region40: #{tpu_custom_call.1} parent=1 // pred_region
      %66 = dma.done [#allocation4], 128
    $region41: #{tpu_custom_call.1} parent=1 // pred_fallthru
      _
    // Predicated region
    $region42: #{tpu_custom_call.1} parent=1 // pred_check
      _
    $region43: #{tpu_custom_call.1} parent=1 // pred_check_branch
      %68 = sbr.rel (0) target = $region45
    $region44: #{tpu_custom_call.1} parent=1 // pred_region
      %69 = dma.done [#allocation6], 128
    $region45: #{tpu_custom_call.1} parent=1 // pred_fallthru
      _
    // Predicated region
    $region46: #{tpu_custom_call.1} parent=1 // pred_check
      _
    $region47: #{tpu_custom_call.1} parent=1 // pred_check_branch
      %71 = sbr.rel (0) target = $region49
    $region48: #{tpu_custom_call.1} parent=1 // pred_region
      %72 = dma.done [#allocation6], 1024
    $region49: #{tpu_custom_call.1} parent=1 // pred_fallthru
      _
    %v74 = vld [vmem:[#allocation3] sm:$0xff]
    %v75 = vpack.c.bf16 %v74, %v74
    %v76 = vld [vmem:[#allocation5] sm:$0xf]
    %v77 = vld [vmem:[#allocation5 + $0x4] sm:$0xf]
    %v78 = vld [vmem:[%s2] sm:$0x3]
    %80 = vset.pattern.permute.xlu0 16
    %81 = vperm.xlu0 %80, %v74
    %v82 = vpop.permute.xlu0 %81
    %v84 = vlaneseq
    %v85 = vshrl.u32 %v84, 7
    %v86 = vsub.s32 0, %v85
    %v87 = vrot.slane %v78, %v86
    %v88 = vmul.f32 %v82, %v87
    %89 = vset.pattern.permute.xlu0 17
    %90 = vperm.xlu0 %89, %v74
    %v91 = vpop.permute.xlu0 %90
    %v93 = vlaneseq
    %v94 = vshrl.u32 %v93, 7
    %v95 = vsub.s32 1, %v94
    %v96 = vrot.slane %v78, %v95
    %v97 = vmul.f32 %v91, %v96
    %v98 = vadd.f32 %v88, %v97
    %v101 = vunpack.c.l.b16 %v76
    %v102 = vunpack.c.l.b16 %v77
    %v103 = vpack.c.b16 %v102, %v101
    %vm105 = vcmask 130048
    %v107 = vsel %vm105, %v75, 0
    %109 = vmatprep.subr.bf16.mxu0 0
    %110 = vmatpush1.bf16.msra.mxu0 0
    %111 = vmatprep.subr.bf16.mxu0 0
    %112 = vmatpush1.bf16.msra.mxu0 0
    %113 = vmatprep.subr.bf16.mxu0 0
    %114 = vmatpush1.bf16.msra.mxu0 0
    %115 = vmatprep.subr.bf16.mxu0 0
    %116 = vmatpush1.bf16.msra.mxu0 0
    %117 = vmatprep.subr.bf16.mxu0 0
    %118 = vmatpush1.bf16.msra.mxu0 0
    %119 = vmatprep.subr.bf16.mxu0 0
    %120 = vmatpush1.bf16.msra.mxu0 0
    %121 = vmatprep.subr.bf16.mxu0 0
    %122 = vmatpush1.bf16.msra.mxu0 0
    %123 = vmatprep.subr.bf16.mxu0 0
    %124 = vmatpush1.bf16.msra.mxu0 %v103
    %125 = vmatprep.subr.bf16.mxu0 0
    %126 = vmatpush2.bf16.msra.mxu0 0
    %127 = vmatprep.subr.bf16.mxu0 0
    %128 = vmatpush2.bf16.msra.mxu0 0
    %129 = vmatprep.subr.bf16.mxu0 0
    %130 = vmatpush2.bf16.msra.mxu0 0
    %131 = vmatprep.subr.bf16.mxu0 0
    %132 = vmatpush2.bf16.msra.mxu0 0
    %133 = vmatprep.subr.bf16.mxu0 0
    %134 = vmatpush2.bf16.msra.mxu0 0
    %135 = vmatprep.subr.bf16.mxu0 0
    %136 = vmatpush2.bf16.msra.mxu0 0
    %137 = vmatprep.subr.bf16.mxu0 0
    %138 = vmatpush2.bf16.msra.mxu0 0
    %139 = vmatprep.subr.bf16.mxu0 0
    %140 = vmatpush2.bf16.msra.mxu0 0
    %141 = vmatprep.mubr.bf16.mxu0 0
    %142 = vmatmul.mubr.bf16.gmra.mxu0 %v107
    %v143 = vpop.f32.mrf.mxu0
    %v144 = vadd.f32 %v98, %v143
    %v145 = vpop.f32.mrf.mxu0
    %v146 = vpop.f32.mrf.mxu0
    %v147 = vpop.f32.mrf.mxu0
    %148 = vdwg.mxu0
    %v149 = vld [vmem:[%s3] sm:$0x1]
    %150 = vset.pattern.permute.xlu0 18
    %151 = vperm.xlu0 %150, %v74
    %v152 = vpop.permute.xlu0 %151
    %v155 = vlaneseq
    %v156 = vshrl.u32 %v155, 7
    %v157 = vsub.s32 0, %v156
    %v158 = vrot.slane %v149, %v157
    %v160 = vmul.f32 %v152, %v158
    %v161 = vadd.f32 %v144, %v160
    %v162 = vld [vmem:[%s4] sm:$0x1]
    %v164 = vlaneseq
    %v165 = vshrl.u32 %v164, 7
    %v166 = vsub.s32 0, %v165
    %v167 = vrot.slane %v162, %v166
    %v169 = vadd.f32 %v161, %v167
    %v170 = vtanh.pop %v169
    %v171 = vpack.c.bf16 %v170, %v170
    %v172 = vld [vmem:[#allocation7] sm:$0xf]
    %v173 = vld [vmem:[#allocation7 + $0x4] sm:$0xf]
    %v174 = vld [vmem:[#allocation7 + $0x8] sm:$0xf]
    %v175 = vld [vmem:[#allocation7 + $0xc] sm:$0xf]
    %v176 = vld [vmem:[#allocation7 + $0x10] sm:$0xf]
    %v177 = vld [vmem:[#allocation7 + $0x14] sm:$0xf]
    %v178 = vld [vmem:[#allocation7 + $0x18] sm:$0xf]
    %v179 = vld [vmem:[#allocation7 + $0x1c] sm:$0xf]
    %v180 = vld [vmem:[#allocation7 + $0x20] sm:$0xf]
    %v181 = vld [vmem:[#allocation7 + $0x24] sm:$0xf]
    %v182 = vld [vmem:[#allocation7 + $0x28] sm:$0xf]
    %v183 = vld [vmem:[#allocation7 + $0x2c] sm:$0xf]
    %v184 = vld [vmem:[#allocation7 + $0x30] sm:$0xf]
    %v185 = vld [vmem:[#allocation7 + $0x34] sm:$0xf]
    %v186 = vld [vmem:[#allocation7 + $0x38] sm:$0xf]
    %v187 = vld [vmem:[#allocation7 + $0x3c] sm:$0xf]
    %v188 = vld [vmem:[%s6] sm:$0x1]
    %v190 = vlaneseq
    %v191 = vshrl.u32 %v190, 7
    %v192 = vsub.s32 0, %v191
    %v193 = vrot.slane %v188, %v192
    %v211 = vunpack.c.l.b16 %v172
    %v212 = vunpack.c.l.b16 %v173
    %v213 = vunpack.c.l.b16 %v174
    %v214 = vunpack.c.l.b16 %v175
    %v215 = vunpack.c.l.b16 %v176
    %v216 = vunpack.c.l.b16 %v177
    %v217 = vunpack.c.l.b16 %v178
    %v218 = vunpack.c.l.b16 %v179
    %v219 = vunpack.c.l.b16 %v180
    %v220 = vunpack.c.l.b16 %v181
    %v221 = vunpack.c.l.b16 %v182
    %v222 = vunpack.c.l.b16 %v183
    %v223 = vunpack.c.l.b16 %v184
    %v224 = vunpack.c.l.b16 %v185
    %v225 = vunpack.c.l.b16 %v186
    %v226 = vunpack.c.l.b16 %v187
    %v227 = vpack.c.b16 %v212, %v211
    %v228 = vpack.c.b16 %v214, %v213
    %v229 = vpack.c.b16 %v216, %v215
    %v230 = vpack.c.b16 %v218, %v217
    %v231 = vpack.c.b16 %v220, %v219
    %v232 = vpack.c.b16 %v222, %v221
    %v233 = vpack.c.b16 %v224, %v223
    %v234 = vpack.c.b16 %v226, %v225
    %243 = vmatprep.subr.bf16.mxu0 0
    %244 = vmatpush1.bf16.msra.mxu0 %v234
    %245 = vmatprep.subr.bf16.mxu0 0
    %246 = vmatpush1.bf16.msra.mxu0 %v233
    %247 = vmatprep.subr.bf16.mxu0 0
    %248 = vmatpush1.bf16.msra.mxu0 %v232
    %249 = vmatprep.subr.bf16.mxu0 0
    %250 = vmatpush1.bf16.msra.mxu0 %v231
    %251 = vmatprep.subr.bf16.mxu0 0
    %252 = vmatpush1.bf16.msra.mxu0 %v230
    %253 = vmatprep.subr.bf16.mxu0 0
    %254 = vmatpush1.bf16.msra.mxu0 %v229
    %255 = vmatprep.subr.bf16.mxu0 0
    %256 = vmatpush1.bf16.msra.mxu0 %v228
    %257 = vmatprep.subr.bf16.mxu0 0
    %258 = vmatpush1.bf16.msra.mxu0 %v227
    %259 = vmatprep.subr.bf16.mxu0 0
    %260 = vmatpush2.bf16.msra.mxu0 0
    %261 = vmatprep.subr.bf16.mxu0 0
    %262 = vmatpush2.bf16.msra.mxu0 0
    %263 = vmatprep.subr.bf16.mxu0 0
    %264 = vmatpush2.bf16.msra.mxu0 0
    %265 = vmatprep.subr.bf16.mxu0 0
    %266 = vmatpush2.bf16.msra.mxu0 0
    %267 = vmatprep.subr.bf16.mxu0 0
    %268 = vmatpush2.bf16.msra.mxu0 0
    %269 = vmatprep.subr.bf16.mxu0 0
    %270 = vmatpush2.bf16.msra.mxu0 0
    %271 = vmatprep.subr.bf16.mxu0 0
    %272 = vmatpush2.bf16.msra.mxu0 0
    %273 = vmatprep.subr.bf16.mxu0 0
    %274 = vmatpush2.bf16.msra.mxu0 0
    %275 = vmatprep.mubr.bf16.mxu0 0
    %276 = vmatmul.mubr.bf16.gmra.mxu0 %v171
    %v277 = vpop.f32.mrf.mxu0
    %v278 = vadd.f32 %v193, %v277
    %v279 = vpop.f32.mrf.mxu0
    %v280 = vpop.f32.mrf.mxu0
    %v281 = vpop.f32.mrf.mxu0
    %282 = vdwg.mxu0
    %v283 = vmul.f32 %v278, 0.01
    %v284 = vmax.f32 %v278, %v283
    %v285 = vld [vmem:[%s7] sm:$0x1]
    %v287 = vlaneseq
    %v288 = vshrl.u32 %v287, 7
    %v289 = vsub.s32 0, %v288
    %v290 = vrot.slane %v285, %v289
    %v292 = vmul.f32 %v284, %v290
    %293 = vadd.xlane.f32.xlu0 %v292
    %v294 = vpop.xlane.xlu0 %293
    %v295 = vld [vmem:[#allocation2] sm:$0x1]
    %v297 = vlaneseq
    %v298 = vshrl.u32 %v297, 7
    %v299 = vsub.s32 0, %v298
    %v300 = vrot.slane %v295, %v299
    %v302 = vadd.f32 %v294, %v300
    %v303 = vxor.u32 %v302, 2147483648
    %v304 = vmul.f32 %v303, 1.442695
    %v305 = vpow.pop %v304
    %v306 = vadd.f32 %v305, 1.0
    %v307 = vrcp.pop %v306
    %v308 = vmul.f32 1.0, %v307
    %vm309 = vcmask 7168
    %310 = vst.msk [vmem:[%s9] sm:$0xff] %vm309, %v308
    // Predicated region
    $region50: #{tpu_custom_call.1} parent=1 // pred_check
      _
    $region51: #{tpu_custom_call.1} parent=1 // pred_check_branch
      %312 = sbr.rel (0) target = $region53
    $region52: #{tpu_custom_call.1} parent=1 // pred_region
      _
    $region53: #{tpu_custom_call.1} parent=1 // pred_fallthru
      _
    // Predicated region
    $region54: #{tpu_custom_call.1} parent=1 // pred_check
      _
    $region55: #{tpu_custom_call.1} parent=1 // pred_check_branch
      %314 = sbr.rel (0) target = $region57
    $region56: #{tpu_custom_call.1} parent=1 // pred_region
      _
    $region57: #{tpu_custom_call.1} parent=1 // pred_fallthru
      _
    %315 = vsyncpa [#allocation4], 1
    %316 = vsyncpa [#allocation6], 1

</llo_original>
